<compile_context>
chip_gen: v6e
topology: v6e:2x2x1
jax: 0.10.0
libtpu: 0.0.40
codegen_flags: <defaults>
</compile_context>

<pallas_src>
import math
import jax
import jax.numpy as jnp
from jax.experimental import pallas as pl
from jax.experimental.pallas import tpu as pltpu


def fcnn_kernel(x_ref,
                w1_ref, b1_ref,
                w2_ref, b2_ref,
                w3_ref, ws_ref, bo_ref,
                o_ref):
    """One batch tile of the fused MLP + skip projection.

    Biases are f32; activations are cast to the weight dtype only at the MXU
    inputs; all accumulation and element-wise math is f32.
    """
    cdt = w1_ref.dtype                     # compute dtype of the MXU operands
    f32 = jnp.float32
    xc = x_ref[...].astype(cdt)

    # Layer 1: Linear(16 -> 32) + ReLU
    h = jnp.dot(xc, w1_ref[...], preferred_element_type=f32) + b1_ref[...]
    h = jnp.maximum(h, 0.0)

    # Layer 2: Linear(32 -> 64) + ReLU
    h = jnp.dot(h.astype(cdt), w2_ref[...], preferred_element_type=f32) + b2_ref[...]
    h = jnp.maximum(h, 0.0)

    # Layer 3 (Linear(64 -> 32)) + skip projection (Linear(16 -> 32)).
    # Skip bias pre-folded into bo.  Both dots summed in one f32 expression
    # (lets the v7x MXU result buffer absorb the second accumulation).
    # NOTE: the [W1|Ws] layer-1 fusion (4 matmuls -> 3) is deliberately not
    # taken; only do it if profiling shows the vmatmul-push slot binds.
    out = (jnp.dot(h.astype(cdt), w3_ref[...], preferred_element_type=f32)
           + jnp.dot(xc, ws_ref[...], preferred_element_type=f32)
           + bo_ref[...])

    # Unpadded (BT, 32) store: 32 == full output dim, so no lane padding and no
    # wrapper slice pass.  A (BT/4,128) lane-dense repack would make the vst
    # unmasked, but the HBM bytes written are already minimal; skipped for
    # lowering safety.
    o_ref[...] = out.astype(o_ref.dtype)


def _round_up(v, m):
    return ((v + m - 1) // m) * m


def fully_connected_nn(x, params, *, block_batch=1024):
    """Gridded, pipelined Pallas forward pass (streams x/out, weights resident)."""
    w1, b1, w2, b2, w3, b3, ws, bs = params
    B, IN = x.shape
    H = w3.shape[1]
    f32 = jnp.float32

    # Fold skip bias into layer-3 bias; keep all biases f32.
    bo = b3.astype(f32) + bs.astype(f32)
    b1f = b1.astype(f32)
    b2f = b2.astype(f32)

    # Batch tile: large (per-step overhead amortization), multiple of 8, but
    # capped near ceil(B/2) so small batches still produce >= 2 tiles (v7x has
    # 2 TensorCores sharding the "parallel" batch axis).
    half = _round_up(pl.cdiv(B, 2), 8)
    BT = max(8, min(_round_up(block_batch, 8), half))
    n_tiles = pl.cdiv(B, BT)      # ragged last tile is masked by Pallas

    # Constant index_map -> operand stays VMEM-resident across grid steps.
    resident = lambda a: pl.BlockSpec(a.shape, lambda i: (0,) * a.ndim)

    out = pl.pallas_call(
        fcnn_kernel,
        out_shape=jax.ShapeDtypeStruct((B, H), x.dtype),
        grid_spec=pltpu.PrefetchScalarGridSpec(
            num_scalar_prefetch=0,
            grid=(n_tiles,),
            in_specs=[
                # TODO(synk): optional lane-dense x repack (B,16)->(B/8,128) is a
                # small further DMA win; do after confirming output-side gains.
                pl.BlockSpec((BT, IN), lambda i: (i, 0)),    # streamed x tiles
                resident(w1), resident(b1f),
                resident(w2), resident(b2f),
                resident(w3), resident(ws), resident(bo),
            ],
            out_specs=pl.BlockSpec((BT, H), lambda i: (i, 0)),
        ),
        compiler_params=pltpu.CompilerParams(
            dimension_semantics=("parallel",)),              # v7x: 2 TCs
    )(x, w1, b1f, w2, b2f, w3, ws, bo)

    return out


def xavier_uniform(key, fan_in, fan_out, dtype=jnp.float32):
    """Xavier/Glorot uniform init; weight stored in (in, out) layout."""
    bound = math.sqrt(6.0 / (fan_in + fan_out))
    return jax.random.uniform(key, (fan_in, fan_out), dtype=dtype,
                              minval=-bound, maxval=bound)


def init_params(key, input_size, layers_sizes, hidden_size, dtype=jnp.float32):
    assert layers_sizes != [0] and len(layers_sizes) > 1, \
        "demo config exercises the multi-layer + skip_projection path"
    k1, k2, k3, k4 = jax.random.split(key, 4)
    w1 = xavier_uniform(k1, input_size, layers_sizes[0], dtype)
    b1 = jnp.zeros((1, layers_sizes[0]), dtype)
    w2 = xavier_uniform(k2, layers_sizes[0], layers_sizes[1], dtype)
    b2 = jnp.zeros((1, layers_sizes[1]), dtype)
    w3 = xavier_uniform(k3, layers_sizes[1], hidden_size, dtype)
    b3 = jnp.zeros((1, hidden_size), dtype)
    ws = xavier_uniform(k4, input_size, hidden_size, dtype)
    bs = jnp.zeros((1, hidden_size), dtype)
    return (w1, b1, w2, b2, w3, b3, ws, bs)


def cast_weights(params, dtype):
    """Cast weights only (biases stay f32) — bf16 MXU path on v6e/v7x."""
    w1, b1, w2, b2, w3, b3, ws, bs = params
    return (w1.astype(dtype), b1, w2.astype(dtype), b2,
            w3.astype(dtype), b3, ws.astype(dtype), bs)


def reference_forward(x, params):
    """Pure-JAX reference mirroring the kernel's mixed-precision recipe."""
    w1, b1, w2, b2, w3, b3, ws, bs = params
    cdt = w1.dtype
    f32 = jnp.float32
    h = jnp.maximum(jnp.dot(x.astype(cdt), w1, preferred_element_type=f32)
                    + b1.astype(f32), 0.0)
    h = jnp.maximum(jnp.dot(h.astype(cdt), w2, preferred_element_type=f32)
                    + b2.astype(f32), 0.0)
    out = jnp.dot(h.astype(cdt), w3, preferred_element_type=f32) + b3.astype(f32)
    skip = jnp.dot(x.astype(cdt), ws, preferred_element_type=f32) + bs.astype(f32)
    return out + skip


if __name__ == "__main__":
    input_size, layers_sizes, hidden_size = 16, [32, 64], 32
    batch = 200  # not a multiple of the tile: exercises ragged-block masking

    key = jax.random.PRNGKey(0)
    kx, kp = jax.random.split(key)
    x = jax.random.normal(kx, (batch, input_size), dtype=jnp.float32)
    params = init_params(kp, input_size, layers_sizes, hidden_size)

    # The module zero-inits biases; perturb them so the fused-bias path is
    # numerically exercised by the check.
    w1, b1, w2, b2, w3, b3, ws, bs = params
    kb1, kb2, kb3, kbs = jax.random.split(jax.random.PRNGKey(1), 4)
    params = (w1, 0.1 * jax.random.normal(kb1, b1.shape), w2,
              0.1 * jax.random.normal(kb2, b2.shape), w3,
              0.1 * jax.random.normal(kb3, b3.shape), ws,
              0.1 * jax.random.normal(kbs, bs.shape))

    # f32 path (exact).  B=200 -> BT=104, grid=2 (2 tiles, ragged last block).
    out = jax.block_until_ready(fully_connected_nn(x, params))
    ref = reference_forward(x, params)
    assert out.shape == (batch, hidden_size)
    assert out.dtype == x.dtype
    assert jnp.allclose(out, ref, atol=1e-5, rtol=1e-5), "f32 mismatch vs reference"

    # Full bf16 streaming path (bf16 x in, bf16 out, bf16 MXU, f32 accumulation
    # and f32 VPU math) — the bandwidth-saving recipe for v6e/v7x.
    x_bf16 = x.astype(jnp.bfloat16)
    params_bf16 = cast_weights(params, jnp.bfloat16)
    out_bf16 = jax.block_until_ready(fully_connected_nn(x_bf16, params_bf16))
    ref_bf16 = reference_forward(x_bf16, params_bf16)
    assert out_bf16.dtype == jnp.bfloat16
    assert jnp.allclose(out_bf16.astype(jnp.float32),
                        ref_bf16.astype(jnp.float32),
                        atol=2e-2, rtol=2e-2), "bf16 mismatch vs reference"

    print("KERNEL_OK")
</pallas_src>

<mosaic_0001>
module attributes {stable_mosaic.version = 11 : i64} {
  func.func @fcnn_kernel(%arg0: i32, %arg1: memref<104x16xf32, #tpu.memory_space<vmem>>, %arg2: memref<16x32xf32, #tpu.memory_space<vmem>>, %arg3: memref<1x32xf32, #tpu.memory_space<vmem>>, %arg4: memref<32x64xf32, #tpu.memory_space<vmem>>, %arg5: memref<1x64xf32, #tpu.memory_space<vmem>>, %arg6: memref<64x32xf32, #tpu.memory_space<vmem>>, %arg7: memref<16x32xf32, #tpu.memory_space<vmem>>, %arg8: memref<1x32xf32, #tpu.memory_space<vmem>>, %arg9: memref<104x32xf32, #tpu.memory_space<vmem>>) attributes {dimension_semantics = [#tpu.dimension_semantics<parallel>], iteration_bounds = array<i64: 2>, scalar_prefetch = 0 : i64, scratch_operands = 0 : i64, tpu.core_type = #tpu.core_type<tc>, window_params = [{transform_indices = @transform_0, window_bounds = array<i64: 104, 16>}, {pipeline_mode = #tpu.pipeline_mode<synchronous>, transform_indices = @transform_1, window_bounds = array<i64: 16, 32>}, {pipeline_mode = #tpu.pipeline_mode<synchronous>, transform_indices = @transform_2, window_bounds = array<i64: 1, 32>}, {pipeline_mode = #tpu.pipeline_mode<synchronous>, transform_indices = @transform_3, window_bounds = array<i64: 32, 64>}, {pipeline_mode = #tpu.pipeline_mode<synchronous>, transform_indices = @transform_4, window_bounds = array<i64: 1, 64>}, {pipeline_mode = #tpu.pipeline_mode<synchronous>, transform_indices = @transform_5, window_bounds = array<i64: 64, 32>}, {pipeline_mode = #tpu.pipeline_mode<synchronous>, transform_indices = @transform_6, window_bounds = array<i64: 16, 32>}, {pipeline_mode = #tpu.pipeline_mode<synchronous>, transform_indices = @transform_7, window_bounds = array<i64: 1, 32>}, {transform_indices = @transform_8, window_bounds = array<i64: 104, 32>}]} {
    %c0 = arith.constant 0 : index
    %c0_0 = arith.constant 0 : index
    %0 = vector.load %arg1[%c0, %c0_0] : memref<104x16xf32, #tpu.memory_space<vmem>>, vector<104x16xf32>
    %c0_1 = arith.constant 0 : index
    %c0_2 = arith.constant 0 : index
    %1 = vector.load %arg2[%c0_1, %c0_2] : memref<16x32xf32, #tpu.memory_space<vmem>>, vector<16x32xf32>
    %cst = arith.constant dense<0.000000e+00> : vector<104x32xf32>
    %2 = tpu.matmul %0, %1, %cst {dimension_numbers = #tpu.dot_dimension_numbers<[1], [0], [0], [1], [0, 0, 1, 1], [], []>} : vector<104x16xf32>, vector<16x32xf32>, vector<104x32xf32> -> vector<104x32xf32>
    %c0_3 = arith.constant 0 : index
    %c0_4 = arith.constant 0 : index
    %3 = vector.load %arg3[%c0_3, %c0_4] : memref<1x32xf32, #tpu.memory_space<vmem>>, vector<1x32xf32>
    %4 = vector.broadcast %3 : vector<1x32xf32> to vector<104x32xf32>
    %5 = arith.addf %2, %4 : vector<104x32xf32>
    %cst_5 = arith.constant 0.000000e+00 : f32
    %6 = vector.broadcast %cst_5 : f32 to vector<104x32xf32>
    %7 = arith.maximumf %5, %6 : vector<104x32xf32>
    %c0_6 = arith.constant 0 : index
    %c0_7 = arith.constant 0 : index
    %8 = vector.load %arg4[%c0_6, %c0_7] : memref<32x64xf32, #tpu.memory_space<vmem>>, vector<32x64xf32>
    %cst_8 = arith.constant dense<0.000000e+00> : vector<104x64xf32>
    %9 = tpu.matmul %7, %8, %cst_8 {dimension_numbers = #tpu.dot_dimension_numbers<[1], [0], [0], [1], [0, 0, 1, 1], [], []>} : vector<104x32xf32>, vector<32x64xf32>, vector<104x64xf32> -> vector<104x64xf32>
    %c0_9 = arith.constant 0 : index
    %c0_10 = arith.constant 0 : index
    %10 = vector.load %arg5[%c0_9, %c0_10] : memref<1x64xf32, #tpu.memory_space<vmem>>, vector<1x64xf32>
    %11 = vector.broadcast %10 : vector<1x64xf32> to vector<104x64xf32>
    %12 = arith.addf %9, %11 : vector<104x64xf32>
    %cst_11 = arith.constant 0.000000e+00 : f32
    %13 = vector.broadcast %cst_11 : f32 to vector<104x64xf32>
    %14 = arith.maximumf %12, %13 : vector<104x64xf32>
    %c0_12 = arith.constant 0 : index
    %c0_13 = arith.constant 0 : index
    %15 = vector.load %arg6[%c0_12, %c0_13] : memref<64x32xf32, #tpu.memory_space<vmem>>, vector<64x32xf32>
    %cst_14 = arith.constant dense<0.000000e+00> : vector<104x32xf32>
    %16 = tpu.matmul %14, %15, %cst_14 {dimension_numbers = #tpu.dot_dimension_numbers<[1], [0], [0], [1], [0, 0, 1, 1], [], []>} : vector<104x64xf32>, vector<64x32xf32>, vector<104x32xf32> -> vector<104x32xf32>
    %c0_15 = arith.constant 0 : index
    %c0_16 = arith.constant 0 : index
    %17 = vector.load %arg7[%c0_15, %c0_16] : memref<16x32xf32, #tpu.memory_space<vmem>>, vector<16x32xf32>
    %cst_17 = arith.constant dense<0.000000e+00> : vector<104x32xf32>
    %18 = tpu.matmul %0, %17, %cst_17 {dimension_numbers = #tpu.dot_dimension_numbers<[1], [0], [0], [1], [0, 0, 1, 1], [], []>} : vector<104x16xf32>, vector<16x32xf32>, vector<104x32xf32> -> vector<104x32xf32>
    %19 = arith.addf %16, %18 : vector<104x32xf32>
    %c0_18 = arith.constant 0 : index
    %c0_19 = arith.constant 0 : index
    %20 = vector.load %arg8[%c0_18, %c0_19] : memref<1x32xf32, #tpu.memory_space<vmem>>, vector<1x32xf32>
    %21 = vector.broadcast %20 : vector<1x32xf32> to vector<104x32xf32>
    %22 = arith.addf %19, %21 : vector<104x32xf32>
    %c0_20 = arith.constant 0 : index
    %c0_21 = arith.constant 0 : index
    %23 = vector.load %arg9[%c0_20, %c0_21] : memref<104x32xf32, #tpu.memory_space<vmem>>, vector<104x32xf32>
    tpu.vector_store %arg9[%c0_20, %c0_21], %22 {strides = array<i32>} : memref<104x32xf32, #tpu.memory_space<vmem>>, vector<104x32xf32>,
    return
  }
  func.func @transform_0(%arg0: i32) -> (i32, i32) {
    %c0_i32 = arith.constant 0 : i32
    %c0_i32_0 = arith.constant 0 : i32
    return %arg0, %c0_i32 : i32, i32
  }
  func.func @transform_1(%arg0: i32) -> (i32, i32) {
    %c0_i32 = arith.constant 0 : i32
    %c0_i32_0 = arith.constant 0 : i32
    %c0_i32_1 = arith.constant 0 : i32
    return %c0_i32, %c0_i32_0 : i32, i32
  }
  func.func @transform_2(%arg0: i32) -> (i32, i32) {
    %c0_i32 = arith.constant 0 : i32
    %c0_i32_0 = arith.constant 0 : i32
    %c0_i32_1 = arith.constant 0 : i32
    return %c0_i32, %c0_i32_0 : i32, i32
  }
  func.func @transform_3(%arg0: i32) -> (i32, i32) {
    %c0_i32 = arith.constant 0 : i32
    %c0_i32_0 = arith.constant 0 : i32
    %c0_i32_1 = arith.constant 0 : i32
    return %c0_i32, %c0_i32_0 : i32, i32
  }
  func.func @transform_4(%arg0: i32) -> (i32, i32) {
    %c0_i32 = arith.constant 0 : i32
    %c0_i32_0 = arith.constant 0 : i32
    %c0_i32_1 = arith.constant 0 : i32
    return %c0_i32, %c0_i32_0 : i32, i32
  }
  func.func @transform_5(%arg0: i32) -> (i32, i32) {
    %c0_i32 = arith.constant 0 : i32
    %c0_i32_0 = arith.constant 0 : i32
    %c0_i32_1 = arith.constant 0 : i32
    return %c0_i32, %c0_i32_0 : i32, i32
  }
  func.func @transform_6(%arg0: i32) -> (i32, i32) {
    %c0_i32 = arith.constant 0 : i32
    %c0_i32_0 = arith.constant 0 : i32
    %c0_i32_1 = arith.constant 0 : i32
    return %c0_i32, %c0_i32_0 : i32, i32
  }
  func.func @transform_7(%arg0: i32) -> (i32, i32) {
    %c0_i32 = arith.constant 0 : i32
    %c0_i32_0 = arith.constant 0 : i32
    %c0_i32_1 = arith.constant 0 : i32
    return %c0_i32, %c0_i32_0 : i32, i32
  }
  func.func @transform_8(%arg0: i32) -> (i32, i32) {
    %c0_i32 = arith.constant 0 : i32
    %c0_i32_0 = arith.constant 0 : i32
    return %arg0, %c0_i32 : i32, i32
  }
}

</mosaic_0001>

<llo_original>
// kernel: tpu_custom_call.1
$region0: #{tpu_custom_call.1}
  #allocation0 [shape = 'u32[]', space=smem, size = 0x4, offset = 0x4, fixed_abs, tag = 'smem constant byte address 0x4 - core index']
  #allocation1 [shape = 'u32[144,128]{1,0:T(1,128)}', space=vmem, size = 0x12000, scoped, tag = 'internal scratch']
  %s0 = inlined_call_operand.vmem [shape: f32[200,16], index: 0, kind: input, shape index: {}]
  %s1 = inlined_call_operand.vmem [shape: f32[16,32], index: 1, kind: input, shape index: {}]
  %s2 = inlined_call_operand.vmem [shape: f32[1,32], index: 2, kind: input, shape index: {}]
  %s3 = inlined_call_operand.vmem [shape: f32[32,64], index: 3, kind: input, shape index: {}]
  %s4 = inlined_call_operand.vmem [shape: f32[1,64], index: 4, kind: input, shape index: {}]
  %s5 = inlined_call_operand.vmem [shape: f32[64,32], index: 5, kind: input, shape index: {}]
  %s6 = inlined_call_operand.vmem [shape: f32[16,32], index: 6, kind: input, shape index: {}]
  %s7 = inlined_call_operand.vmem [shape: f32[1,32], index: 7, kind: input, shape index: {}]
  %s8 = inlined_call_operand.vmem [shape: f32[200,32], index: 8, kind: output, shape index: {}]
  %s9 = sld [smem:[#allocation0]]
  $region113: #{tpu_custom_call.1} parent=0
    _
  %s11 = ssub.s32 1, %s9
  %s12 = scalar_select 0, %s11, %s9
  $region1: #{tpu_custom_call.1} parent=0
    #allocation2 [shape = 'u8[106496]{0}', space=vmem, size = 0x1a000, scoped, tag = 'output window, operand 0']
    loop: start=0, step=1, limit=4
    $region2: #{tpu_custom_call.1} parent=1 // loop_pre_header
      _
    $region3: #{tpu_custom_call.1} parent=1 // loop_header
      %s14 = sphi 0, %s18
      %p15 = scmp.ge.s32.totalorder %s14, 4
      %s24 = sphi 0, %s26
      %s27 = sphi 0, %s24
      %s28 = sphi 0, %s27
      %s44 = sphi 0, %s28
      %s48 = sphi 0, %s48
      %s50 = sphi 0, %s48
      %s51 = sphi 0, %s50
      %s65 = sphi 0, %s51
      %s69 = sphi 0, %s69
      %s71 = sphi 0, %s69
      %s72 = sphi 0, %s71
      %s86 = sphi 0, %s72
      %s90 = sphi 0, %s90
      %s92 = sphi 0, %s90
      %s93 = sphi 0, %s92
      %s107 = sphi 0, %s93
      %s111 = sphi 0, %s111
      %s113 = sphi 0, %s111
      %s114 = sphi 0, %s113
      %s128 = sphi 0, %s114
      %s132 = sphi 0, %s132
      %s134 = sphi 0, %s132
      %s135 = sphi 0, %s134
      %s149 = sphi 0, %s135
      %s153 = sphi 0, %s153
      %s155 = sphi 0, %s153
      %s156 = sphi 0, %s155
      %s170 = sphi 0, %s156
      %s174 = sphi 0, %s174
      %s176 = sphi 0, %s174
      %s177 = sphi 0, %s176
      %s191 = sphi 0, %s177
      %s197 = sphi 0, %s199
      %s200 = sphi 0, %s197
      %s201 = sphi 0, %s200
      %s217 = sphi 0, %s201
    $region4: #{tpu_custom_call.1} parent=1 // loop_header_branch
      %17 = sbr.rel (%p15) target = $region8
    $region5: #{tpu_custom_call.1} parent=1 // loop_body
      %s19 = ssub.s32 %s14, 1
      %s20 = ssub.s32 %s14, 2
      %s21 = sadd.s32 %s14, 1
      %s22 = ssub.s32 %s14, %s21
      %p23 = scmp.eq.s32.totalorder %s22, 0
      %s25 = sadd.s32 %s24, 1
      %s26 = scalar_select %p23, %s24, %s25
      %p29 = pneg %p23
      %p30 = scmp.eq.s32.totalorder %s14, 1
      %p31 = por %p29, %p30
      %p32 = scmp.ne.s32.totalorder %s24, %s27
      %p33 = scmp.eq.s32.totalorder %s14, 0
      %p34 = por %p32, %p33
      %p35 = scmp.ne.s32.totalorder %s24, %s27
      %p36 = scmp.eq.s32.totalorder %s19, 1
      %p37 = por %p35, %p36
      %p38 = scmp.ne.s32.totalorder %s27, %s28
      %p39 = scmp.eq.s32.totalorder %s19, 0
      %p40 = por %p38, %p39
      %p41 = scmp.ne.s32.totalorder %s27, %s28
      %p42 = scmp.eq.s32.totalorder %s20, 1
      %p43 = por %p41, %p42
      %p45 = scmp.ne.s32.totalorder %s28, %s44
      %p46 = scmp.eq.s32.totalorder %s20, 0
      %p47 = por %p45, %p46
      %s49 = sadd.s32 %s48, 1
      %p52 = scmp.eq.s32.totalorder %s14, 1
      %p53 = scmp.ne.s32.totalorder %s48, %s50
      %p54 = scmp.eq.s32.totalorder %s14, 0
      %p55 = por %p53, %p54
      %p56 = scmp.ne.s32.totalorder %s48, %s50
      %p57 = scmp.eq.s32.totalorder %s19, 1
      %p58 = por %p56, %p57
      %p59 = scmp.ne.s32.totalorder %s50, %s51
      %p60 = scmp.eq.s32.totalorder %s19, 0
      %p61 = por %p59, %p60
      %p62 = scmp.ne.s32.totalorder %s50, %s51
      %p63 = scmp.eq.s32.totalorder %s20, 1
      %p64 = por %p62, %p63
      %p66 = scmp.ne.s32.totalorder %s51, %s65
      %p67 = scmp.eq.s32.totalorder %s20, 0
      %p68 = por %p66, %p67
      %s70 = sadd.s32 %s69, 1
      %p73 = scmp.eq.s32.totalorder %s14, 1
      %p74 = scmp.ne.s32.totalorder %s69, %s71
      %p75 = scmp.eq.s32.totalorder %s14, 0
      %p76 = por %p74, %p75
      %p77 = scmp.ne.s32.totalorder %s69, %s71
      %p78 = scmp.eq.s32.totalorder %s19, 1
      %p79 = por %p77, %p78
      %p80 = scmp.ne.s32.totalorder %s71, %s72
      %p81 = scmp.eq.s32.totalorder %s19, 0
      %p82 = por %p80, %p81
      %p83 = scmp.ne.s32.totalorder %s71, %s72
      %p84 = scmp.eq.s32.totalorder %s20, 1
      %p85 = por %p83, %p84
      %p87 = scmp.ne.s32.totalorder %s72, %s86
      %p88 = scmp.eq.s32.totalorder %s20, 0
      %p89 = por %p87, %p88
      %s91 = sadd.s32 %s90, 1
      %p94 = scmp.eq.s32.totalorder %s14, 1
      %p95 = scmp.ne.s32.totalorder %s90, %s92
      %p96 = scmp.eq.s32.totalorder %s14, 0
      %p97 = por %p95, %p96
      %p98 = scmp.ne.s32.totalorder %s90, %s92
      %p99 = scmp.eq.s32.totalorder %s19, 1
      %p100 = por %p98, %p99
      %p101 = scmp.ne.s32.totalorder %s92, %s93
      %p102 = scmp.eq.s32.totalorder %s19, 0
      %p103 = por %p101, %p102
      %p104 = scmp.ne.s32.totalorder %s92, %s93
      %p105 = scmp.eq.s32.totalorder %s20, 1
      %p106 = por %p104, %p105
      %p108 = scmp.ne.s32.totalorder %s93, %s107
      %p109 = scmp.eq.s32.totalorder %s20, 0
      %p110 = por %p108, %p109
      %s112 = sadd.s32 %s111, 1
      %p115 = scmp.eq.s32.totalorder %s14, 1
      %p116 = scmp.ne.s32.totalorder %s111, %s113
      %p117 = scmp.eq.s32.totalorder %s14, 0
      %p118 = por %p116, %p117
      %p119 = scmp.ne.s32.totalorder %s111, %s113
      %p120 = scmp.eq.s32.totalorder %s19, 1
      %p121 = por %p119, %p120
      %p122 = scmp.ne.s32.totalorder %s113, %s114
      %p123 = scmp.eq.s32.totalorder %s19, 0
      %p124 = por %p122, %p123
      %p125 = scmp.ne.s32.totalorder %s113, %s114
      %p126 = scmp.eq.s32.totalorder %s20, 1
      %p127 = por %p125, %p126
      %p129 = scmp.ne.s32.totalorder %s114, %s128
      %p130 = scmp.eq.s32.totalorder %s20, 0
      %p131 = por %p129, %p130
      %s133 = sadd.s32 %s132, 1
      %p136 = scmp.eq.s32.totalorder %s14, 1
      %p137 = scmp.ne.s32.totalorder %s132, %s134
      %p138 = scmp.eq.s32.totalorder %s14, 0
      %p139 = por %p137, %p138
      %p140 = scmp.ne.s32.totalorder %s132, %s134
      %p141 = scmp.eq.s32.totalorder %s19, 1
      %p142 = por %p140, %p141
      %p143 = scmp.ne.s32.totalorder %s134, %s135
      %p144 = scmp.eq.s32.totalorder %s19, 0
      %p145 = por %p143, %p144
      %p146 = scmp.ne.s32.totalorder %s134, %s135
      %p147 = scmp.eq.s32.totalorder %s20, 1
      %p148 = por %p146, %p147
      %p150 = scmp.ne.s32.totalorder %s135, %s149
      %p151 = scmp.eq.s32.totalorder %s20, 0
      %p152 = por %p150, %p151
      %s154 = sadd.s32 %s153, 1
      %p157 = scmp.eq.s32.totalorder %s14, 1
      %p158 = scmp.ne.s32.totalorder %s153, %s155
      %p159 = scmp.eq.s32.totalorder %s14, 0
      %p160 = por %p158, %p159
      %p161 = scmp.ne.s32.totalorder %s153, %s155
      %p162 = scmp.eq.s32.totalorder %s19, 1
      %p163 = por %p161, %p162
      %p164 = scmp.ne.s32.totalorder %s155, %s156
      %p165 = scmp.eq.s32.totalorder %s19, 0
      %p166 = por %p164, %p165
      %p167 = scmp.ne.s32.totalorder %s155, %s156
      %p168 = scmp.eq.s32.totalorder %s20, 1
      %p169 = por %p167, %p168
      %p171 = scmp.ne.s32.totalorder %s156, %s170
      %p172 = scmp.eq.s32.totalorder %s20, 0
      %p173 = por %p171, %p172
      %s175 = sadd.s32 %s174, 1
      %p178 = scmp.eq.s32.totalorder %s14, 1
      %p179 = scmp.ne.s32.totalorder %s174, %s176
      %p180 = scmp.eq.s32.totalorder %s14, 0
      %p181 = por %p179, %p180
      %p182 = scmp.ne.s32.totalorder %s174, %s176
      %p183 = scmp.eq.s32.totalorder %s19, 1
      %p184 = por %p182, %p183
      %p185 = scmp.ne.s32.totalorder %s176, %s177
      %p186 = scmp.eq.s32.totalorder %s19, 0
      %p187 = por %p185, %p186
      %p188 = scmp.ne.s32.totalorder %s176, %s177
      %p189 = scmp.eq.s32.totalorder %s20, 1
      %p190 = por %p188, %p189
      %p192 = scmp.ne.s32.totalorder %s177, %s191
      %p193 = scmp.eq.s32.totalorder %s20, 0
      %p194 = por %p192, %p193
      %s195 = ssub.s32 %s14, %s21
      %p196 = scmp.eq.s32.totalorder %s195, 0
      %s198 = sadd.s32 %s197, 1
      %s199 = scalar_select %p196, %s197, %s198
      %p202 = pneg %p196
      %p203 = scmp.eq.s32.totalorder %s14, 1
      %p204 = por %p202, %p203
      %p205 = scmp.ne.s32.totalorder %s197, %s200
      %p206 = scmp.eq.s32.totalorder %s14, 0
      %p207 = por %p205, %p206
      %p208 = scmp.ne.s32.totalorder %s197, %s200
      %p209 = scmp.eq.s32.totalorder %s19, 1
      %p210 = por %p208, %p209
      %p211 = scmp.ne.s32.totalorder %s200, %s201
      %p212 = scmp.eq.s32.totalorder %s19, 0
      %p213 = por %p211, %p212
      %p214 = scmp.ne.s32.totalorder %s200, %s201
      %p215 = scmp.eq.s32.totalorder %s20, 1
      %p216 = por %p214, %p215
      %p218 = scmp.ne.s32.totalorder %s201, %s217
      %p219 = scmp.eq.s32.totalorder %s20, 0
      %p220 = por %p218, %p219
      %p221 = scmp.le.s32.totalorder 1, %s14
      %p222 = scmp.lt.s32.totalorder %s14, 3
      %p223 = pnand %p221, %p222
      %p224 = pneg %p223
      // Predicated region
      $region9: #{tpu_custom_call.1} parent=5 // pred_check
        _
      $region10: #{tpu_custom_call.1} parent=5 // pred_check_branch
        %226 = sbr.rel (%p223) target = $region12
      $region11: #{tpu_custom_call.1} parent=5 // pred_region
        %s227 = ssub.s32 %s14, 1
        // Predicated region
        $region13: #{tpu_custom_call.1} parent=11 // pred_check
          %p228 = pneg %p61
        $region14: #{tpu_custom_call.1} parent=11 // pred_check_branch
          %230 = sbr.rel (%p228) target = $region16
        $region15: #{tpu_custom_call.1} parent=11 // pred_region
          _
        $region16: #{tpu_custom_call.1} parent=11 // pred_fallthru
          _
        // Predicated region
        $region17: #{tpu_custom_call.1} parent=11 // pred_check
          %p231 = pneg %p82
        $region18: #{tpu_custom_call.1} parent=11 // pred_check_branch
          %233 = sbr.rel (%p231) target = $region20
        $region19: #{tpu_custom_call.1} parent=11 // pred_region
          _
        $region20: #{tpu_custom_call.1} parent=11 // pred_fallthru
          _
        // Predicated region
        $region21: #{tpu_custom_call.1} parent=11 // pred_check
          %p234 = pneg %p103
        $region22: #{tpu_custom_call.1} parent=11 // pred_check_branch
          %236 = sbr.rel (%p234) target = $region24
        $region23: #{tpu_custom_call.1} parent=11 // pred_region
          _
        $region24: #{tpu_custom_call.1} parent=11 // pred_fallthru
          _
        // Predicated region
        $region25: #{tpu_custom_call.1} parent=11 // pred_check
          %p237 = pneg %p124
        $region26: #{tpu_custom_call.1} parent=11 // pred_check_branch
          %239 = sbr.rel (%p237) target = $region28
        $region27: #{tpu_custom_call.1} parent=11 // pred_region
          _
        $region28: #{tpu_custom_call.1} parent=11 // pred_fallthru
          _
        // Predicated region
        $region29: #{tpu_custom_call.1} parent=11 // pred_check
          %p240 = pneg %p145
        $region30: #{tpu_custom_call.1} parent=11 // pred_check_branch
          %242 = sbr.rel (%p240) target = $region32
        $region31: #{tpu_custom_call.1} parent=11 // pred_region
          _
        $region32: #{tpu_custom_call.1} parent=11 // pred_fallthru
          _
        // Predicated region
        $region33: #{tpu_custom_call.1} parent=11 // pred_check
          %p243 = pneg %p166
        $region34: #{tpu_custom_call.1} parent=11 // pred_check_branch
          %245 = sbr.rel (%p243) target = $region36
        $region35: #{tpu_custom_call.1} parent=11 // pred_region
          _
        $region36: #{tpu_custom_call.1} parent=11 // pred_fallthru
          _
        // Predicated region
        $region37: #{tpu_custom_call.1} parent=11 // pred_check
          %p246 = pneg %p187
        $region38: #{tpu_custom_call.1} parent=11 // pred_check_branch
          %248 = sbr.rel (%p246) target = $region40
        $region39: #{tpu_custom_call.1} parent=11 // pred_region
          _
        $region40: #{tpu_custom_call.1} parent=11 // pred_fallthru
          _
      $region12: #{tpu_custom_call.1} parent=5 // pred_fallthru
        _
      %p249 = scmp.lt.s32.totalorder %s14, 2
      // Predicated region
      $region41: #{tpu_custom_call.1} parent=5 // pred_check
        %p250 = pneg %p249
      $region42: #{tpu_custom_call.1} parent=5 // pred_check_branch
        %252 = sbr.rel (%p250) target = $region44
      $region43: #{tpu_custom_call.1} parent=5 // pred_region
        // Predicated region
        $region45: #{tpu_custom_call.1} parent=43 // pred_check
          %p253 = pneg %p34
        $region46: #{tpu_custom_call.1} parent=43 // pred_check_branch
          %255 = sbr.rel (%p253) target = $region48
        $region47: #{tpu_custom_call.1} parent=43 // pred_region
          %s256 = smul.u32 13, %s14
          %s257 = ssub.s32 25, %s256
          %p258 = scmp.lt.s32.totalorder %s257, 13
          %s259 = scalar_select %p258, %s257, 13
          %s260 = smul.u32 128, %s259
          %p261 = scmp.lt.s32.totalorder %s256, 24
          %s262 = scalar_select %p261, %s256, 24
          %s263 = smul.addr %s262, 8
          %s264 = scalar_lea.vmem %s0, %s263
          %s265 = smul.u32 13, %s14
          %s266 = ssub.s32 25, %s265
          %p267 = scmp.lt.s32.totalorder %s266, 13
          %s268 = scalar_select %p267, %s266, 13
          %s269 = smul.u32 128, %s268
        $region48: #{tpu_custom_call.1} parent=43 // pred_fallthru
          _
      $region44: #{tpu_custom_call.1} parent=5 // pred_fallthru
        _
      %p270 = scmp.le.s32.totalorder 1, %s14
      %p271 = scmp.lt.s32.totalorder %s14, 3
      %p272 = pnand %p270, %p271
      %p273 = pneg %p272
      // Predicated region
      $region49: #{tpu_custom_call.1} parent=5 // pred_check
        _
      $region50: #{tpu_custom_call.1} parent=5 // pred_check_branch
        %275 = sbr.rel (%p272) target = $region52
      $region51: #{tpu_custom_call.1} parent=5 // pred_region
        %s276 = ssub.s32 %s14, 1
        %s277 = smul.u32 13, %s19
        %s278 = ssub.s32 25, %s277
        %p279 = scmp.lt.s32.totalorder %s278, 13
        %s280 = scalar_select %p279, %s278, 13
        %s281 = smul.u32 128, %s280
        %p282 = scmp.lt.s32.totalorder %s277, 24
        %s283 = scalar_select %p282, %s277, 24
        %s284 = smul.addr %s283, 8
        %s285 = scalar_lea.vmem %s0, %s284
        %p286 = pneg %p40
        %p287 = pneg %p37
        %p288 = pneg %p61
        %p289 = pneg %p58
        %p290 = pneg %p82
        %p291 = pneg %p79
        %p292 = pneg %p103
        %p293 = pneg %p100
        %p294 = pneg %p124
        %p295 = pneg %p121
        %p296 = pneg %p145
        %p297 = pneg %p142
        %p298 = pneg %p166
        %p299 = pneg %p163
        %p300 = pneg %p187
        %p301 = pneg %p184
        %p302 = pneg %p213
        %p303 = pneg %p210
        %s304 = sand.u32 %s200, 1
        %s305 = sand.u32 %s200, 1
        %s306 = smul.addr %s305, 104
        %s307 = scalar_lea.vmem [#allocation2], %s306
        %s308 = smul.u32 13, %s19
        %s309 = ssub.s32 25, %s308
        %p310 = scmp.lt.s32.totalorder %s309, 13
        %s311 = scalar_select %p310, %s309, 13
        %s312 = smul.u32 128, %s311
        %p313 = scmp.lt.s32.totalorder %s308, 24
        %s314 = scalar_select %p313, %s308, 24
        %s315 = smul.addr %s314, 8
        %s316 = scalar_lea.vmem %s0, %s315
        %s317 = smul.u32 13, %s19
        %s318 = ssub.s32 25, %s317
        %p319 = scmp.lt.s32.totalorder %s318, 13
        %s320 = scalar_select %p319, %s318, 13
        %s321 = smul.u32 128, %s320
        %s322 = smul.u32 13, %s19
        %s323 = ssub.s32 25, %s322
        %p324 = scmp.lt.s32.totalorder %s323, 13
        %s325 = scalar_select %p324, %s323, 13
        %s326 = smul.u32 128, %s325
        %v327 = vld [vmem:[%s316] sm:$0xff]
        %v328 = vld [vmem:[%s316 + $0x8] sm:$0xff]
        %v329 = vld [vmem:[%s316 + $0x10] sm:$0xff]
        %v330 = vld [vmem:[%s316 + $0x18] sm:$0xff]
        %v331 = vld [vmem:[%s316 + $0x20] sm:$0xff]
        %v332 = vld [vmem:[%s316 + $0x28] sm:$0xff]
        %v333 = vld [vmem:[%s316 + $0x30] sm:$0xff]
        %v334 = vld [vmem:[%s316 + $0x38] sm:$0xff]
        %v335 = vld [vmem:[%s316 + $0x40] sm:$0xff]
        %v336 = vld [vmem:[%s316 + $0x48] sm:$0xff]
        %v337 = vld [vmem:[%s316 + $0x50] sm:$0xff]
        %v338 = vld [vmem:[%s316 + $0x58] sm:$0xff]
        %v339 = vld [vmem:[%s316 + $0x60] sm:$0xff]
        %v340 = vld [vmem:[%s1] sm:$0xff]
        %v341 = vld [vmem:[%s1 + $0x8] sm:$0xff]
        %v342 = vld [vmem:[%s2] sm:$0x1]
        %v344 = vlaneseq
        %v345 = vshrl.u32 %v344, 7
        %v346 = vsub.s32 0, %v345
        %v347 = vrot.slane %v342, %v346
        %vm349 = vcmask 130048
        %v351 = vsel %vm349, %v327, 0
        %v354 = vsel %vm349, %v328, 0
        %v357 = vsel %vm349, %v329, 0
        %v360 = vsel %vm349, %v330, 0
        %v363 = vsel %vm349, %v331, 0
        %v366 = vsel %vm349, %v332, 0
        %v369 = vsel %vm349, %v333, 0
        %v372 = vsel %vm349, %v334, 0
        %v375 = vsel %vm349, %v335, 0
        %v378 = vsel %vm349, %v336, 0
        %v381 = vsel %vm349, %v337, 0
        %v384 = vsel %vm349, %v338, 0
        %v387 = vsel %vm349, %v339, 0
        %389 = vmatprep.subr.mxu0 0.0
        %390 = vmatpush1.msra.mxu0 0.0
        %391 = vmatprep.subr.mxu0 0.0
        %392 = vmatpush1.msra.mxu0 0.0
        %393 = vmatprep.subr.mxu0 0.0
        %394 = vmatpush1.msra.mxu0 0.0
        %395 = vmatprep.subr.mxu0 0.0
        %396 = vmatpush1.msra.mxu0 0.0
        %397 = vmatprep.subr.mxu0 0.0
        %398 = vmatpush1.msra.mxu0 0.0
        %399 = vmatprep.subr.mxu0 0.0
        %400 = vmatpush1.msra.mxu0 0.0
        %401 = vmatprep.subr.mxu0 0.0
        %402 = vmatpush1.msra.mxu0 0.0
        %403 = vmatprep.subr.mxu0 0.0
        %404 = vmatpush1.msra.mxu0 0.0
        %405 = vmatprep.subr.mxu0 0.0
        %406 = vmatpush1.msra.mxu0 0.0
        %407 = vmatprep.subr.mxu0 0.0
        %408 = vmatpush1.msra.mxu0 0.0
        %409 = vmatprep.subr.mxu0 0.0
        %410 = vmatpush1.msra.mxu0 0.0
        %411 = vmatprep.subr.mxu0 0.0
        %412 = vmatpush1.msra.mxu0 0.0
        %413 = vmatprep.subr.mxu0 0.0
        %414 = vmatpush1.msra.mxu0 0.0
        %415 = vmatprep.subr.mxu0 0.0
        %416 = vmatpush1.msra.mxu0 0.0
        %417 = vmatprep.subr.mxu0 0.0
        %418 = vmatpush1.msra.mxu0 %v341
        %419 = vmatprep.subr.mxu0 0.0
        %420 = vmatpush1.msra.mxu0 %v340
        %421 = vmatprep.subr.mxu0 0.0
        %422 = vmatpush2.msra.mxu0 0.0
        %423 = vmatprep.subr.mxu0 0.0
        %424 = vmatpush2.msra.mxu0 0.0
        %425 = vmatprep.subr.mxu0 0.0
        %426 = vmatpush2.msra.mxu0 0.0
        %427 = vmatprep.subr.mxu0 0.0
        %428 = vmatpush2.msra.mxu0 0.0
        %429 = vmatprep.subr.mxu0 0.0
        %430 = vmatpush2.msra.mxu0 0.0
        %431 = vmatprep.subr.mxu0 0.0
        %432 = vmatpush2.msra.mxu0 0.0
        %433 = vmatprep.subr.mxu0 0.0
        %434 = vmatpush2.msra.mxu0 0.0
        %435 = vmatprep.subr.mxu0 0.0
        %436 = vmatpush2.msra.mxu0 0.0
        %437 = vmatprep.subr.mxu0 0.0
        %438 = vmatpush2.msra.mxu0 0.0
        %439 = vmatprep.subr.mxu0 0.0
        %440 = vmatpush2.msra.mxu0 0.0
        %441 = vmatprep.subr.mxu0 0.0
        %442 = vmatpush2.msra.mxu0 0.0
        %443 = vmatprep.subr.mxu0 0.0
        %444 = vmatpush2.msra.mxu0 0.0
        %445 = vmatprep.subr.mxu0 0.0
        %446 = vmatpush2.msra.mxu0 0.0
        %447 = vmatprep.subr.mxu0 0.0
        %448 = vmatpush2.msra.mxu0 0.0
        %449 = vmatprep.subr.mxu0 0.0
        %450 = vmatpush2.msra.mxu0 0.0
        %451 = vmatprep.subr.mxu0 0.0
        %452 = vmatpush2.msra.mxu0 0.0
        %453 = vmatprep.mubr.f32.mxu0 0.0
        %454 = vmatmul.mubr.f32.gmra.mxu0 %v351
        %v455 = vpop.f32.mrf.mxu0
        %v456 = vadd.f32 %v347, %v455
        %v457 = vpop.f32.mrf.mxu0
        %458 = vmatprep.mubr.f32.mxu0 0.0
        %459 = vmatmul.mubr.f32.gmra.mxu0 %v354
        %v460 = vpop.f32.mrf.mxu0
        %v461 = vadd.f32 %v347, %v460
        %v462 = vpop.f32.mrf.mxu0
        %463 = vmatprep.mubr.f32.mxu0 0.0
        %464 = vmatmul.mubr.f32.gmra.mxu0 %v357
        %v465 = vpop.f32.mrf.mxu0
        %v466 = vadd.f32 %v347, %v465
        %v467 = vpop.f32.mrf.mxu0
        %468 = vmatprep.mubr.f32.mxu0 0.0
        %469 = vmatmul.mubr.f32.gmra.mxu0 %v360
        %v470 = vpop.f32.mrf.mxu0
        %v471 = vadd.f32 %v347, %v470
        %v472 = vpop.f32.mrf.mxu0
        %473 = vmatprep.mubr.f32.mxu0 0.0
        %474 = vmatmul.mubr.f32.gmra.mxu0 %v363
        %v475 = vpop.f32.mrf.mxu0
        %v476 = vadd.f32 %v347, %v475
        %v477 = vpop.f32.mrf.mxu0
        %478 = vmatprep.mubr.f32.mxu0 0.0
        %479 = vmatmul.mubr.f32.gmra.mxu0 %v366
        %v480 = vpop.f32.mrf.mxu0
        %v481 = vadd.f32 %v347, %v480
        %v482 = vpop.f32.mrf.mxu0
        %483 = vmatprep.mubr.f32.mxu0 0.0
        %484 = vmatmul.mubr.f32.gmra.mxu0 %v369
        %v485 = vpop.f32.mrf.mxu0
        %v486 = vadd.f32 %v347, %v485
        %v487 = vpop.f32.mrf.mxu0
        %488 = vmatprep.mubr.f32.mxu0 0.0
        %489 = vmatmul.mubr.f32.gmra.mxu0 %v372
        %v490 = vpop.f32.mrf.mxu0
        %v491 = vadd.f32 %v347, %v490
        %v492 = vpop.f32.mrf.mxu0
        %493 = vmatprep.mubr.f32.mxu0 0.0
        %494 = vmatmul.mubr.f32.gmra.mxu0 %v375
        %v495 = vpop.f32.mrf.mxu0
        %v496 = vadd.f32 %v347, %v495
        %v497 = vpop.f32.mrf.mxu0
        %498 = vmatprep.mubr.f32.mxu0 0.0
        %499 = vmatmul.mubr.f32.gmra.mxu0 %v378
        %v500 = vpop.f32.mrf.mxu0
        %v501 = vadd.f32 %v347, %v500
        %v502 = vpop.f32.mrf.mxu0
        %503 = vmatprep.mubr.f32.mxu0 0.0
        %504 = vmatmul.mubr.f32.gmra.mxu0 %v381
        %v505 = vpop.f32.mrf.mxu0
        %v506 = vadd.f32 %v347, %v505
        %v507 = vpop.f32.mrf.mxu0
        %508 = vmatprep.mubr.f32.mxu0 0.0
        %509 = vmatmul.mubr.f32.gmra.mxu0 %v384
        %v510 = vpop.f32.mrf.mxu0
        %v511 = vadd.f32 %v347, %v510
        %v512 = vpop.f32.mrf.mxu0
        %513 = vmatprep.mubr.f32.mxu0 0.0
        %514 = vmatmul.mubr.f32.gmra.mxu0 %v387
        %v515 = vpop.f32.mrf.mxu0
        %v516 = vadd.f32 %v347, %v515
        %v517 = vpop.f32.mrf.mxu0
        %518 = vdwg.mxu0
        %v519 = vmax.f32 %v456, 0.0
        %v520 = vmax.f32 %v461, 0.0
        %v521 = vmax.f32 %v466, 0.0
        %v522 = vmax.f32 %v471, 0.0
        %v523 = vmax.f32 %v476, 0.0
        %v524 = vmax.f32 %v481, 0.0
        %v525 = vmax.f32 %v486, 0.0
        %v526 = vmax.f32 %v491, 0.0
        %v527 = vmax.f32 %v496, 0.0
        %v528 = vmax.f32 %v501, 0.0
        %v529 = vmax.f32 %v506, 0.0
        %v530 = vmax.f32 %v511, 0.0
        %v531 = vmax.f32 %v516, 0.0
        %v532 = vld [vmem:[%s3] sm:$0xff]
        %v533 = vld [vmem:[%s3 + $0x8] sm:$0xff]
        %v534 = vld [vmem:[%s3 + $0x10] sm:$0xff]
        %v535 = vld [vmem:[%s3 + $0x18] sm:$0xff]
        %v536 = vld [vmem:[%s4] sm:$0x1]
        %v538 = vlaneseq
        %v539 = vshrl.u32 %v538, 7
        %v540 = vsub.s32 0, %v539
        %v541 = vrot.slane %v536, %v540
        %vm543 = vcmask 261120
        %v545 = vsel %vm543, %v519, 0
        %v548 = vsel %vm543, %v520, 0
        %v551 = vsel %vm543, %v521, 0
        %v554 = vsel %vm543, %v522, 0
        %v557 = vsel %vm543, %v523, 0
        %v560 = vsel %vm543, %v524, 0
        %v563 = vsel %vm543, %v525, 0
        %v566 = vsel %vm543, %v526, 0
        %v569 = vsel %vm543, %v527, 0
        %v572 = vsel %vm543, %v528, 0
        %v575 = vsel %vm543, %v529, 0
        %v578 = vsel %vm543, %v530, 0
        %v581 = vsel %vm543, %v531, 0
        %583 = vmatprep.subr.mxu0 0.0
        %584 = vmatpush1.msra.mxu0 0.0
        %585 = vmatprep.subr.mxu0 0.0
        %586 = vmatpush1.msra.mxu0 0.0
        %587 = vmatprep.subr.mxu0 0.0
        %588 = vmatpush1.msra.mxu0 0.0
        %589 = vmatprep.subr.mxu0 0.0
        %590 = vmatpush1.msra.mxu0 0.0
        %591 = vmatprep.subr.mxu0 0.0
        %592 = vmatpush1.msra.mxu0 0.0
        %593 = vmatprep.subr.mxu0 0.0
        %594 = vmatpush1.msra.mxu0 0.0
        %595 = vmatprep.subr.mxu0 0.0
        %596 = vmatpush1.msra.mxu0 0.0
        %597 = vmatprep.subr.mxu0 0.0
        %598 = vmatpush1.msra.mxu0 0.0
        %599 = vmatprep.subr.mxu0 0.0
        %600 = vmatpush1.msra.mxu0 0.0
        %601 = vmatprep.subr.mxu0 0.0
        %602 = vmatpush1.msra.mxu0 0.0
        %603 = vmatprep.subr.mxu0 0.0
        %604 = vmatpush1.msra.mxu0 0.0
        %605 = vmatprep.subr.mxu0 0.0
        %606 = vmatpush1.msra.mxu0 0.0
        %607 = vmatprep.subr.mxu0 0.0
        %608 = vmatpush1.msra.mxu0 %v535
        %609 = vmatprep.subr.mxu0 0.0
        %610 = vmatpush1.msra.mxu0 %v534
        %611 = vmatprep.subr.mxu0 0.0
        %612 = vmatpush1.msra.mxu0 %v533
        %613 = vmatprep.subr.mxu0 0.0
        %614 = vmatpush1.msra.mxu0 %v532
        %615 = vmatprep.subr.mxu0 0.0
        %616 = vmatpush2.msra.mxu0 0.0
        %617 = vmatprep.subr.mxu0 0.0
        %618 = vmatpush2.msra.mxu0 0.0
        %619 = vmatprep.subr.mxu0 0.0
        %620 = vmatpush2.msra.mxu0 0.0
        %621 = vmatprep.subr.mxu0 0.0
        %622 = vmatpush2.msra.mxu0 0.0
        %623 = vmatprep.subr.mxu0 0.0
        %624 = vmatpush2.msra.mxu0 0.0
        %625 = vmatprep.subr.mxu0 0.0
        %626 = vmatpush2.msra.mxu0 0.0
        %627 = vmatprep.subr.mxu0 0.0
        %628 = vmatpush2.msra.mxu0 0.0
        %629 = vmatprep.subr.mxu0 0.0
        %630 = vmatpush2.msra.mxu0 0.0
        %631 = vmatprep.subr.mxu0 0.0
        %632 = vmatpush2.msra.mxu0 0.0
        %633 = vmatprep.subr.mxu0 0.0
        %634 = vmatpush2.msra.mxu0 0.0
        %635 = vmatprep.subr.mxu0 0.0
        %636 = vmatpush2.msra.mxu0 0.0
        %637 = vmatprep.subr.mxu0 0.0
        %638 = vmatpush2.msra.mxu0 0.0
        %639 = vmatprep.subr.mxu0 0.0
        %640 = vmatpush2.msra.mxu0 0.0
        %641 = vmatprep.subr.mxu0 0.0
        %642 = vmatpush2.msra.mxu0 0.0
        %643 = vmatprep.subr.mxu0 0.0
        %644 = vmatpush2.msra.mxu0 0.0
        %645 = vmatprep.subr.mxu0 0.0
        %646 = vmatpush2.msra.mxu0 0.0
        %647 = vmatprep.mubr.f32.mxu0 0.0
        %648 = vmatmul.mubr.f32.gmra.mxu0 %v545
        %v649 = vpop.f32.mrf.mxu0
        %v650 = vadd.f32 %v541, %v649
        %v651 = vpop.f32.mrf.mxu0
        %652 = vmatprep.mubr.f32.mxu0 0.0
        %653 = vmatmul.mubr.f32.gmra.mxu0 %v548
        %v654 = vpop.f32.mrf.mxu0
        %v655 = vadd.f32 %v541, %v654
        %v656 = vpop.f32.mrf.mxu0
        %657 = vmatprep.mubr.f32.mxu0 0.0
        %658 = vmatmul.mubr.f32.gmra.mxu0 %v551
        %v659 = vpop.f32.mrf.mxu0
        %v660 = vadd.f32 %v541, %v659
        %v661 = vpop.f32.mrf.mxu0
        %662 = vmatprep.mubr.f32.mxu0 0.0
        %663 = vmatmul.mubr.f32.gmra.mxu0 %v554
        %v664 = vpop.f32.mrf.mxu0
        %v665 = vadd.f32 %v541, %v664
        %v666 = vpop.f32.mrf.mxu0
        %667 = vmatprep.mubr.f32.mxu0 0.0
        %668 = vmatmul.mubr.f32.gmra.mxu0 %v557
        %v669 = vpop.f32.mrf.mxu0
        %v670 = vadd.f32 %v541, %v669
        %v671 = vpop.f32.mrf.mxu0
        %672 = vmatprep.mubr.f32.mxu0 0.0
        %673 = vmatmul.mubr.f32.gmra.mxu0 %v560
        %v674 = vpop.f32.mrf.mxu0
        %v675 = vadd.f32 %v541, %v674
        %v676 = vpop.f32.mrf.mxu0
        %677 = vmatprep.mubr.f32.mxu0 0.0
        %678 = vmatmul.mubr.f32.gmra.mxu0 %v563
        %v679 = vpop.f32.mrf.mxu0
        %v680 = vadd.f32 %v541, %v679
        %v681 = vpop.f32.mrf.mxu0
        %682 = vmatprep.mubr.f32.mxu0 0.0
        %683 = vmatmul.mubr.f32.gmra.mxu0 %v566
        %v684 = vpop.f32.mrf.mxu0
        %v685 = vadd.f32 %v541, %v684
        %v686 = vpop.f32.mrf.mxu0
        %687 = vmatprep.mubr.f32.mxu0 0.0
        %688 = vmatmul.mubr.f32.gmra.mxu0 %v569
        %v689 = vpop.f32.mrf.mxu0
        %v690 = vadd.f32 %v541, %v689
        %v691 = vpop.f32.mrf.mxu0
        %692 = vmatprep.mubr.f32.mxu0 0.0
        %693 = vmatmul.mubr.f32.gmra.mxu0 %v572
        %v694 = vpop.f32.mrf.mxu0
        %v695 = vadd.f32 %v541, %v694
        %v696 = vpop.f32.mrf.mxu0
        %697 = vmatprep.mubr.f32.mxu0 0.0
        %698 = vmatmul.mubr.f32.gmra.mxu0 %v575
        %v699 = vpop.f32.mrf.mxu0
        %v700 = vadd.f32 %v541, %v699
        %v701 = vpop.f32.mrf.mxu0
        %702 = vmatprep.mubr.f32.mxu0 0.0
        %703 = vmatmul.mubr.f32.gmra.mxu0 %v578
        %v704 = vpop.f32.mrf.mxu0
        %v705 = vadd.f32 %v541, %v704
        %v706 = vpop.f32.mrf.mxu0
        %707 = vmatprep.mubr.f32.mxu0 0.0
        %708 = vmatmul.mubr.f32.gmra.mxu0 %v581
        %v709 = vpop.f32.mrf.mxu0
        %v710 = vadd.f32 %v541, %v709
        %v711 = vpop.f32.mrf.mxu0
        %712 = vdwg.mxu0
        %v713 = vmax.f32 %v650, 0.0
        %v714 = vmax.f32 %v655, 0.0
        %v715 = vmax.f32 %v660, 0.0
        %v716 = vmax.f32 %v665, 0.0
        %v717 = vmax.f32 %v670, 0.0
        %v718 = vmax.f32 %v675, 0.0
        %v719 = vmax.f32 %v680, 0.0
        %v720 = vmax.f32 %v685, 0.0
        %v721 = vmax.f32 %v690, 0.0
        %v722 = vmax.f32 %v695, 0.0
        %v723 = vmax.f32 %v700, 0.0
        %v724 = vmax.f32 %v705, 0.0
        %v725 = vmax.f32 %v710, 0.0
        %v726 = vld [vmem:[%s5] sm:$0xff]
        %v727 = vld [vmem:[%s5 + $0x8] sm:$0xff]
        %v728 = vld [vmem:[%s5 + $0x10] sm:$0xff]
        %v729 = vld [vmem:[%s5 + $0x18] sm:$0xff]
        %v730 = vld [vmem:[%s5 + $0x20] sm:$0xff]
        %v731 = vld [vmem:[%s5 + $0x28] sm:$0xff]
        %v732 = vld [vmem:[%s5 + $0x30] sm:$0xff]
        %v733 = vld [vmem:[%s5 + $0x38] sm:$0xff]
        %v734 = vld [vmem:[%s6] sm:$0xff]
        %v735 = vld [vmem:[%s6 + $0x8] sm:$0xff]
        %736 = vmatprep.subr.mxu0 0.0
        %737 = vmatpush1.msra.mxu0 0.0
        %738 = vmatprep.subr.mxu0 0.0
        %739 = vmatpush1.msra.mxu0 0.0
        %740 = vmatprep.subr.mxu0 0.0
        %741 = vmatpush1.msra.mxu0 0.0
        %742 = vmatprep.subr.mxu0 0.0
        %743 = vmatpush1.msra.mxu0 0.0
        %744 = vmatprep.subr.mxu0 0.0
        %745 = vmatpush1.msra.mxu0 0.0
        %746 = vmatprep.subr.mxu0 0.0
        %747 = vmatpush1.msra.mxu0 0.0
        %748 = vmatprep.subr.mxu0 0.0
        %749 = vmatpush1.msra.mxu0 0.0
        %750 = vmatprep.subr.mxu0 0.0
        %751 = vmatpush1.msra.mxu0 0.0
        %752 = vmatprep.subr.mxu0 0.0
        %753 = vmatpush1.msra.mxu0 0.0
        %754 = vmatprep.subr.mxu0 0.0
        %755 = vmatpush1.msra.mxu0 0.0
        %756 = vmatprep.subr.mxu0 0.0
        %757 = vmatpush1.msra.mxu0 0.0
        %758 = vmatprep.subr.mxu0 0.0
        %759 = vmatpush1.msra.mxu0 0.0
        %760 = vmatprep.subr.mxu0 0.0
        %761 = vmatpush1.msra.mxu0 0.0
        %762 = vmatprep.subr.mxu0 0.0
        %763 = vmatpush1.msra.mxu0 0.0
        %764 = vmatprep.subr.mxu0 0.0
        %765 = vmatpush1.msra.mxu0 %v735
        %766 = vmatprep.subr.mxu0 0.0
        %767 = vmatpush1.msra.mxu0 %v734
        %768 = vmatprep.subr.mxu0 0.0
        %769 = vmatpush2.msra.mxu0 0.0
        %770 = vmatprep.subr.mxu0 0.0
        %771 = vmatpush2.msra.mxu0 0.0
        %772 = vmatprep.subr.mxu0 0.0
        %773 = vmatpush2.msra.mxu0 0.0
        %774 = vmatprep.subr.mxu0 0.0
        %775 = vmatpush2.msra.mxu0 0.0
        %776 = vmatprep.subr.mxu0 0.0
        %777 = vmatpush2.msra.mxu0 0.0
        %778 = vmatprep.subr.mxu0 0.0
        %779 = vmatpush2.msra.mxu0 0.0
        %780 = vmatprep.subr.mxu0 0.0
        %781 = vmatpush2.msra.mxu0 0.0
        %782 = vmatprep.subr.mxu0 0.0
        %783 = vmatpush2.msra.mxu0 0.0
        %784 = vmatprep.subr.mxu0 0.0
        %785 = vmatpush2.msra.mxu0 0.0
        %786 = vmatprep.subr.mxu0 0.0
        %787 = vmatpush2.msra.mxu0 0.0
        %788 = vmatprep.subr.mxu0 0.0
        %789 = vmatpush2.msra.mxu0 0.0
        %790 = vmatprep.subr.mxu0 0.0
        %791 = vmatpush2.msra.mxu0 0.0
        %792 = vmatprep.subr.mxu0 0.0
        %793 = vmatpush2.msra.mxu0 0.0
        %794 = vmatprep.subr.mxu0 0.0
        %795 = vmatpush2.msra.mxu0 0.0
        %796 = vmatprep.subr.mxu0 0.0
        %797 = vmatpush2.msra.mxu0 0.0
        %798 = vmatprep.subr.mxu0 0.0
        %799 = vmatpush2.msra.mxu0 0.0
        %800 = vmatprep.mubr.f32.mxu0 0.0
        %801 = vmatmul.mubr.f32.gmra.mxu0 %v351
        %v802 = vpop.f32.mrf.mxu0
        %v803 = vadd.f32 0.0, %v802
        %v804 = vpop.f32.mrf.mxu0
        %805 = vmatprep.mubr.f32.mxu0 0.0
        %806 = vmatmul.mubr.f32.gmra.mxu0 %v354
        %v807 = vpop.f32.mrf.mxu0
        %v808 = vadd.f32 0.0, %v807
        %v809 = vpop.f32.mrf.mxu0
        %810 = vmatprep.mubr.f32.mxu0 0.0
        %811 = vmatmul.mubr.f32.gmra.mxu0 %v357
        %v812 = vpop.f32.mrf.mxu0
        %v813 = vadd.f32 0.0, %v812
        %v814 = vpop.f32.mrf.mxu0
        %815 = vmatprep.mubr.f32.mxu0 0.0
        %816 = vmatmul.mubr.f32.gmra.mxu0 %v360
        %v817 = vpop.f32.mrf.mxu0
        %v818 = vadd.f32 0.0, %v817
        %v819 = vpop.f32.mrf.mxu0
        %820 = vmatprep.mubr.f32.mxu0 0.0
        %821 = vmatmul.mubr.f32.gmra.mxu0 %v363
        %v822 = vpop.f32.mrf.mxu0
        %v823 = vadd.f32 0.0, %v822
        %v824 = vpop.f32.mrf.mxu0
        %825 = vmatprep.mubr.f32.mxu0 0.0
        %826 = vmatmul.mubr.f32.gmra.mxu0 %v366
        %v827 = vpop.f32.mrf.mxu0
        %v828 = vadd.f32 0.0, %v827
        %v829 = vpop.f32.mrf.mxu0
        %830 = vmatprep.mubr.f32.mxu0 0.0
        %831 = vmatmul.mubr.f32.gmra.mxu0 %v369
        %v832 = vpop.f32.mrf.mxu0
        %v833 = vadd.f32 0.0, %v832
        %v834 = vpop.f32.mrf.mxu0
        %835 = vmatprep.mubr.f32.mxu0 0.0
        %836 = vmatmul.mubr.f32.gmra.mxu0 %v372
        %v837 = vpop.f32.mrf.mxu0
        %v838 = vadd.f32 0.0, %v837
        %v839 = vpop.f32.mrf.mxu0
        %840 = vmatprep.mubr.f32.mxu0 0.0
        %841 = vmatmul.mubr.f32.gmra.mxu0 %v375
        %v842 = vpop.f32.mrf.mxu0
        %v843 = vadd.f32 0.0, %v842
        %v844 = vpop.f32.mrf.mxu0
        %845 = vmatprep.mubr.f32.mxu0 0.0
        %846 = vmatmul.mubr.f32.gmra.mxu0 %v378
        %v847 = vpop.f32.mrf.mxu0
        %v848 = vadd.f32 0.0, %v847
        %v849 = vpop.f32.mrf.mxu0
        %850 = vmatprep.mubr.f32.mxu0 0.0
        %851 = vmatmul.mubr.f32.gmra.mxu0 %v381
        %v852 = vpop.f32.mrf.mxu0
        %v853 = vadd.f32 0.0, %v852
        %v854 = vpop.f32.mrf.mxu0
        %855 = vmatprep.mubr.f32.mxu0 0.0
        %856 = vmatmul.mubr.f32.gmra.mxu0 %v384
        %v857 = vpop.f32.mrf.mxu0
        %v858 = vadd.f32 0.0, %v857
        %v859 = vpop.f32.mrf.mxu0
        %860 = vmatprep.mubr.f32.mxu0 0.0
        %861 = vmatmul.mubr.f32.gmra.mxu0 %v387
        %v862 = vpop.f32.mrf.mxu0
        %v863 = vadd.f32 0.0, %v862
        %v864 = vpop.f32.mrf.mxu0
        %865 = vdwg.mxu0
        %vm866 = vcmask 523264
        %v868 = vsel %vm866, %v713, 0
        %v871 = vsel %vm866, %v714, 0
        %v874 = vsel %vm866, %v715, 0
        %v877 = vsel %vm866, %v716, 0
        %v880 = vsel %vm866, %v717, 0
        %v883 = vsel %vm866, %v718, 0
        %v886 = vsel %vm866, %v719, 0
        %v889 = vsel %vm866, %v720, 0
        %v892 = vsel %vm866, %v721, 0
        %v895 = vsel %vm866, %v722, 0
        %v898 = vsel %vm866, %v723, 0
        %v901 = vsel %vm866, %v724, 0
        %v904 = vsel %vm866, %v725, 0
        %906 = vmatprep.subr.mxu0 0.0
        %907 = vmatpush1.msra.mxu0 0.0
        %908 = vmatprep.subr.mxu0 0.0
        %909 = vmatpush1.msra.mxu0 0.0
        %910 = vmatprep.subr.mxu0 0.0
        %911 = vmatpush1.msra.mxu0 0.0
        %912 = vmatprep.subr.mxu0 0.0
        %913 = vmatpush1.msra.mxu0 0.0
        %914 = vmatprep.subr.mxu0 0.0
        %915 = vmatpush1.msra.mxu0 0.0
        %916 = vmatprep.subr.mxu0 0.0
        %917 = vmatpush1.msra.mxu0 0.0
        %918 = vmatprep.subr.mxu0 0.0
        %919 = vmatpush1.msra.mxu0 0.0
        %920 = vmatprep.subr.mxu0 0.0
        %921 = vmatpush1.msra.mxu0 0.0
        %922 = vmatprep.subr.mxu0 0.0
        %923 = vmatpush1.msra.mxu0 %v733
        %924 = vmatprep.subr.mxu0 0.0
        %925 = vmatpush1.msra.mxu0 %v732
        %926 = vmatprep.subr.mxu0 0.0
        %927 = vmatpush1.msra.mxu0 %v731
        %928 = vmatprep.subr.mxu0 0.0
        %929 = vmatpush1.msra.mxu0 %v730
        %930 = vmatprep.subr.mxu0 0.0
        %931 = vmatpush1.msra.mxu0 %v729
        %932 = vmatprep.subr.mxu0 0.0
        %933 = vmatpush1.msra.mxu0 %v728
        %934 = vmatprep.subr.mxu0 0.0
        %935 = vmatpush1.msra.mxu0 %v727
        %936 = vmatprep.subr.mxu0 0.0
        %937 = vmatpush1.msra.mxu0 %v726
        %938 = vmatprep.subr.mxu0 0.0
        %939 = vmatpush2.msra.mxu0 0.0
        %940 = vmatprep.subr.mxu0 0.0
        %941 = vmatpush2.msra.mxu0 0.0
        %942 = vmatprep.subr.mxu0 0.0
        %943 = vmatpush2.msra.mxu0 0.0
        %944 = vmatprep.subr.mxu0 0.0
        %945 = vmatpush2.msra.mxu0 0.0
        %946 = vmatprep.subr.mxu0 0.0
        %947 = vmatpush2.msra.mxu0 0.0
        %948 = vmatprep.subr.mxu0 0.0
        %949 = vmatpush2.msra.mxu0 0.0
        %950 = vmatprep.subr.mxu0 0.0
        %951 = vmatpush2.msra.mxu0 0.0
        %952 = vmatprep.subr.mxu0 0.0
        %953 = vmatpush2.msra.mxu0 0.0
        %954 = vmatprep.subr.mxu0 0.0
        %955 = vmatpush2.msra.mxu0 0.0
        %956 = vmatprep.subr.mxu0 0.0
        %957 = vmatpush2.msra.mxu0 0.0
        %958 = vmatprep.subr.mxu0 0.0
        %959 = vmatpush2.msra.mxu0 0.0
        %960 = vmatprep.subr.mxu0 0.0
        %961 = vmatpush2.msra.mxu0 0.0
        %962 = vmatprep.subr.mxu0 0.0
        %963 = vmatpush2.msra.mxu0 0.0
        %964 = vmatprep.subr.mxu0 0.0
        %965 = vmatpush2.msra.mxu0 0.0
        %966 = vmatprep.subr.mxu0 0.0
        %967 = vmatpush2.msra.mxu0 0.0
        %968 = vmatprep.subr.mxu0 0.0
        %969 = vmatpush2.msra.mxu0 0.0
        %970 = vmatprep.mubr.f32.mxu0 0.0
        %971 = vmatmul.mubr.f32.gmra.mxu0 %v868
        %v972 = vpop.f32.mrf.mxu0
        %v973 = vadd.f32 %v803, %v972
        %v974 = vpop.f32.mrf.mxu0
        %975 = vmatprep.mubr.f32.mxu0 0.0
        %976 = vmatmul.mubr.f32.gmra.mxu0 %v871
        %v977 = vpop.f32.mrf.mxu0
        %v978 = vadd.f32 %v808, %v977
        %v979 = vpop.f32.mrf.mxu0
        %980 = vmatprep.mubr.f32.mxu0 0.0
        %981 = vmatmul.mubr.f32.gmra.mxu0 %v874
        %v982 = vpop.f32.mrf.mxu0
        %v983 = vadd.f32 %v813, %v982
        %v984 = vpop.f32.mrf.mxu0
        %985 = vmatprep.mubr.f32.mxu0 0.0
        %986 = vmatmul.mubr.f32.gmra.mxu0 %v877
        %v987 = vpop.f32.mrf.mxu0
        %v988 = vadd.f32 %v818, %v987
        %v989 = vpop.f32.mrf.mxu0
        %990 = vmatprep.mubr.f32.mxu0 0.0
        %991 = vmatmul.mubr.f32.gmra.mxu0 %v880
        %v992 = vpop.f32.mrf.mxu0
        %v993 = vadd.f32 %v823, %v992
        %v994 = vpop.f32.mrf.mxu0
        %995 = vmatprep.mubr.f32.mxu0 0.0
        %996 = vmatmul.mubr.f32.gmra.mxu0 %v883
        %v997 = vpop.f32.mrf.mxu0
        %v998 = vadd.f32 %v828, %v997
        %v999 = vpop.f32.mrf.mxu0
        %1000 = vmatprep.mubr.f32.mxu0 0.0
        %1001 = vmatmul.mubr.f32.gmra.mxu0 %v886
        %v1002 = vpop.f32.mrf.mxu0
        %v1003 = vadd.f32 %v833, %v1002
        %v1004 = vpop.f32.mrf.mxu0
        %1005 = vmatprep.mubr.f32.mxu0 0.0
        %1006 = vmatmul.mubr.f32.gmra.mxu0 %v889
        %v1007 = vpop.f32.mrf.mxu0
        %v1008 = vadd.f32 %v838, %v1007
        %v1009 = vpop.f32.mrf.mxu0
        %1010 = vmatprep.mubr.f32.mxu0 0.0
        %1011 = vmatmul.mubr.f32.gmra.mxu0 %v892
        %v1012 = vpop.f32.mrf.mxu0
        %v1013 = vadd.f32 %v843, %v1012
        %v1014 = vpop.f32.mrf.mxu0
        %1015 = vmatprep.mubr.f32.mxu0 0.0
        %1016 = vmatmul.mubr.f32.gmra.mxu0 %v895
        %v1017 = vpop.f32.mrf.mxu0
        %v1018 = vadd.f32 %v848, %v1017
        %v1019 = vpop.f32.mrf.mxu0
        %1020 = vmatprep.mubr.f32.mxu0 0.0
        %1021 = vmatmul.mubr.f32.gmra.mxu0 %v898
        %v1022 = vpop.f32.mrf.mxu0
        %v1023 = vadd.f32 %v853, %v1022
        %v1024 = vpop.f32.mrf.mxu0
        %1025 = vmatprep.mubr.f32.mxu0 0.0
        %1026 = vmatmul.mubr.f32.gmra.mxu0 %v901
        %v1027 = vpop.f32.mrf.mxu0
        %v1028 = vadd.f32 %v858, %v1027
        %v1029 = vpop.f32.mrf.mxu0
        %1030 = vmatprep.mubr.f32.mxu0 0.0
        %1031 = vmatmul.mubr.f32.gmra.mxu0 %v904
        %v1032 = vpop.f32.mrf.mxu0
        %v1033 = vadd.f32 %v863, %v1032
        %v1034 = vpop.f32.mrf.mxu0
        %1035 = vdwg.mxu0
        %v1036 = vld [vmem:[%s7] sm:$0x1]
        %v1038 = vlaneseq
        %v1039 = vshrl.u32 %v1038, 7
        %v1040 = vsub.s32 0, %v1039
        %v1041 = vrot.slane %v1036, %v1040
        %v1043 = vadd.f32 %v973, %v1041
        %v1044 = vadd.f32 %v978, %v1041
        %v1045 = vadd.f32 %v983, %v1041
        %v1046 = vadd.f32 %v988, %v1041
        %v1047 = vadd.f32 %v993, %v1041
        %v1048 = vadd.f32 %v998, %v1041
        %v1049 = vadd.f32 %v1003, %v1041
        %v1050 = vadd.f32 %v1008, %v1041
        %v1051 = vadd.f32 %v1013, %v1041
        %v1052 = vadd.f32 %v1018, %v1041
        %v1053 = vadd.f32 %v1023, %v1041
        %v1054 = vadd.f32 %v1028, %v1041
        %v1055 = vadd.f32 %v1033, %v1041
        %1056 = vst.msk [vmem:[%s307] sm:$0xff] %vm543, %v1043
        %1057 = vst.msk [vmem:[%s307 + $0x8] sm:$0xff] %vm543, %v1044
        %1058 = vst.msk [vmem:[%s307 + $0x10] sm:$0xff] %vm543, %v1045
        %1059 = vst.msk [vmem:[%s307 + $0x18] sm:$0xff] %vm543, %v1046
        %1060 = vst.msk [vmem:[%s307 + $0x20] sm:$0xff] %vm543, %v1047
        %1061 = vst.msk [vmem:[%s307 + $0x28] sm:$0xff] %vm543, %v1048
        %1062 = vst.msk [vmem:[%s307 + $0x30] sm:$0xff] %vm543, %v1049
        %1063 = vst.msk [vmem:[%s307 + $0x38] sm:$0xff] %vm543, %v1050
        %1064 = vst.msk [vmem:[%s307 + $0x40] sm:$0xff] %vm543, %v1051
        %1065 = vst.msk [vmem:[%s307 + $0x48] sm:$0xff] %vm543, %v1052
        %1066 = vst.msk [vmem:[%s307 + $0x50] sm:$0xff] %vm543, %v1053
        %1067 = vst.msk [vmem:[%s307 + $0x58] sm:$0xff] %vm543, %v1054
        %1068 = vst.msk [vmem:[%s307 + $0x60] sm:$0xff] %vm543, %v1055
        %s1069 = sand.u32 %s200, 1
        %s1070 = sand.u32 %s200, 1
        %s1071 = smul.addr %s1070, 104
        %s1072 = scalar_lea.vmem [#allocation2], %s1071
        // Predicated region
        $region53: #{tpu_custom_call.1} parent=51 // pred_check
          %p1073 = pneg %p210
        $region54: #{tpu_custom_call.1} parent=51 // pred_check_branch
          %1075 = sbr.rel (%p1073) target = $region56
        $region55: #{tpu_custom_call.1} parent=51 // pred_region
          %s1076 = smul.u32 13, %s19
          %s1077 = ssub.s32 25, %s1076
          %p1078 = scmp.lt.s32.totalorder %s1077, 13
          %s1079 = scalar_select %p1078, %s1077, 13
          %s1080 = smul.u32 128, %s1079
          %p1081 = scmp.ne.s32.totalorder 0, %s1080
          %s1082 = smul.addr %s1076, 8
          %s1083 = scalar_lea.vmem %s8, %s1082
          // Predicated region
          $region57: #{tpu_custom_call.1} parent=55 // pred_check
            %p1084 = pneg %p1081
          $region58: #{tpu_custom_call.1} parent=55 // pred_check_branch
            %1086 = sbr.rel (%p1084) target = $region60
          $region59: #{tpu_custom_call.1} parent=55 // pred_region
            // Predicated region
            $region61: #{tpu_custom_call.1} parent=59 // pred_check
              _
            $region62: #{tpu_custom_call.1} parent=59 // pred_check_branch
              %1088 = sbr.rel (0) target = $region64
            $region63: #{tpu_custom_call.1} parent=59 // pred_region
              // Predicated region
              $region83: #{tpu_custom_call.1} parent=63 // pred_check
                _
              $region84: #{tpu_custom_call.1} parent=63 // pred_check_branch
                %1163 = sbr.rel (0) target = $region86
              $region85: #{tpu_custom_call.1} parent=63 // pred_region
                %s1164 = sdiv.u32.pop %s1079, 13
                %s1165 = srem.u32.pop %s1079, 13
                // While loop
                $region87: #{tpu_custom_call.1} parent=85 // loop_pre_header
                  _
                $region88: #{tpu_custom_call.1} parent=85 // loop_header
                  %s1167 = sphi 0, %s1169
                  %p1168 = scmp.ge.s32.totalorder %s1167, %s1164
                  %s1172 = sphi 0, %s1203
                  %s1173 = sphi %s1072, %s1206
                  %s1174 = sphi %s1083, %s1207
                $region89: #{tpu_custom_call.1} parent=85 // loop_header_branch
                  %1171 = sbr.rel (%p1168) target = $region93
                $region90: #{tpu_custom_call.1} parent=85 // loop_body
                  %v1175 = vld [vmem:[%s1173] sm:$0xff]
                  %1176 = vst [vmem:[%s1174] sm:$0xff] %v1175
                  %v1177 = vld [vmem:[%s1173 + $0x8] sm:$0xff]
                  %1178 = vst [vmem:[%s1174 + $0x8] sm:$0xff] %v1177
                  %v1179 = vld [vmem:[%s1173 + $0x10] sm:$0xff]
                  %1180 = vst [vmem:[%s1174 + $0x10] sm:$0xff] %v1179
                  %v1181 = vld [vmem:[%s1173 + $0x18] sm:$0xff]
                  %1182 = vst [vmem:[%s1174 + $0x18] sm:$0xff] %v1181
                  %v1183 = vld [vmem:[%s1173 + $0x20] sm:$0xff]
                  %1184 = vst [vmem:[%s1174 + $0x20] sm:$0xff] %v1183
                  %v1185 = vld [vmem:[%s1173 + $0x28] sm:$0xff]
                  %1186 = vst [vmem:[%s1174 + $0x28] sm:$0xff] %v1185
                  %v1187 = vld [vmem:[%s1173 + $0x30] sm:$0xff]
                  %1188 = vst [vmem:[%s1174 + $0x30] sm:$0xff] %v1187
                  %v1189 = vld [vmem:[%s1173 + $0x38] sm:$0xff]
                  %1190 = vst [vmem:[%s1174 + $0x38] sm:$0xff] %v1189
                  %v1191 = vld [vmem:[%s1173 + $0x40] sm:$0xff]
                  %1192 = vst [vmem:[%s1174 + $0x40] sm:$0xff] %v1191
                  %v1193 = vld [vmem:[%s1173 + $0x48] sm:$0xff]
                  %1194 = vst [vmem:[%s1174 + $0x48] sm:$0xff] %v1193
                  %v1195 = vld [vmem:[%s1173 + $0x50] sm:$0xff]
                  %1196 = vst [vmem:[%s1174 + $0x50] sm:$0xff] %v1195
                  %v1197 = vld [vmem:[%s1173 + $0x58] sm:$0xff]
                  %1198 = vst [vmem:[%s1174 + $0x58] sm:$0xff] %v1197
                  %v1199 = vld [vmem:[%s1173 + $0x60] sm:$0xff]
                  %1200 = vst [vmem:[%s1174 + $0x60] sm:$0xff] %v1199
                  %s1201 = sadd.s32 1, %s1172
                  %p1202 = scmp.ge.s32.totalorder %s1201, %s1164
                  %s1203 = scalar_select %p1202, 0, %s1201
                  %s1204 = smul.u32 %s1203, 104
                  %s1205 = smul.u32 %s1203, 104
                  %s1206 = scalar_lea.vmem %s1072, %s1204 [#allocation2]
                  %s1207 = scalar_lea.vmem %s1083, %s1205
                $region91: #{tpu_custom_call.1} parent=85 // loop_footer
                  %s1169 = sadd.s32 %s1167, 1
                $region92: #{tpu_custom_call.1} parent=85 // loop_footer_branch
                  %1166 = sbr.rel target = $region88
                $region93: #{tpu_custom_call.1} parent=85 // loop_exit
                  _
                %s1208 = sdiv.u32.pop %s1079, 13
                %s1209 = srem.u32.pop %s1079, 13
                %s1210 = smul.u32 %s1208, 13
                %s1211 = smul.u32 8, %s1210
                %s1212 = scalar_lea.vmem %s1072, %s1211 [#allocation2]
                %s1213 = smul.u32 8, %s1210
                %s1214 = scalar_lea.vmem %s1083, %s1213
                // While loop
                $region94: #{tpu_custom_call.1} parent=85 // loop_pre_header
                  _
                $region95: #{tpu_custom_call.1} parent=85 // loop_header
                  %s1216 = sphi 0, %s1218
                  %p1217 = scmp.ge.s32.totalorder %s1216, %s1209
                  %s1221 = sphi 0, %s1228
                  %s1222 = sphi %s1212, %s1231
                  %s1223 = sphi %s1214, %s1232
                $region96: #{tpu_custom_call.1} parent=85 // loop_header_branch
                  %1220 = sbr.rel (%p1217) target = $region100
                $region97: #{tpu_custom_call.1} parent=85 // loop_body
                  %v1224 = vld [vmem:[%s1222] sm:$0xff]
                  %1225 = vst [vmem:[%s1223] sm:$0xff] %v1224
                  %s1226 = sadd.s32 1, %s1221
                  %p1227 = scmp.ge.s32.totalorder %s1226, %s1209
                  %s1228 = scalar_select %p1227, 0, %s1226
                  %s1229 = smul.u32 %s1228, 8
                  %s1230 = smul.u32 %s1228, 8
                  %s1231 = scalar_lea.vmem %s1212, %s1229 [#allocation2]
                  %s1232 = scalar_lea.vmem %s1214, %s1230
                $region98: #{tpu_custom_call.1} parent=85 // loop_footer
                  %s1218 = sadd.s32 %s1216, 1
                $region99: #{tpu_custom_call.1} parent=85 // loop_footer_branch
                  %1215 = sbr.rel target = $region95
                $region100: #{tpu_custom_call.1} parent=85 // loop_exit
                  _
              $region86: #{tpu_custom_call.1} parent=63 // pred_fallthru
                _
              // Predicated region
              $region101: #{tpu_custom_call.1} parent=63 // pred_check
                _
              $region102: #{tpu_custom_call.1} parent=63 // pred_check_branch
                %1234 = sbr.rel target = $region104
              $region103: #{tpu_custom_call.1} parent=63 // pred_region
                _
              $region104: #{tpu_custom_call.1} parent=63 // pred_fallthru
                _
            $region64: #{tpu_custom_call.1} parent=59 // pred_fallthru
              _
            // Predicated region
            $region65: #{tpu_custom_call.1} parent=59 // pred_check
              _
            $region66: #{tpu_custom_call.1} parent=59 // pred_check_branch
              %1090 = sbr.rel target = $region68
            $region67: #{tpu_custom_call.1} parent=59 // pred_region
              %s1092 = ssub.s32 256, 1
              %s1093 = sdiv.u32.pop %s1079, 13
              %s1094 = srem.u32.pop %s1079, 13
              // While loop
              $region69: #{tpu_custom_call.1} parent=67 // loop_pre_header
                _
              $region70: #{tpu_custom_call.1} parent=67 // loop_header
                %s1096 = sphi 0, %s1098
                %p1097 = scmp.ge.s32.totalorder %s1096, %s1093
                %s1101 = sphi 0, %s1132
                %s1102 = sphi %s1072, %s1135
                %s1103 = sphi %s1083, %s1136
              $region71: #{tpu_custom_call.1} parent=67 // loop_header_branch
                %1100 = sbr.rel (%p1097) target = $region75
              $region72: #{tpu_custom_call.1} parent=67 // loop_body
                %v1104 = vld [vmem:[%s1102] sm:%s1092]
                %1105 = vst [vmem:[%s1103] sm:%s1092] %v1104
                %v1106 = vld [vmem:[%s1102 + $0x8] sm:%s1092]
                %1107 = vst [vmem:[%s1103 + $0x8] sm:%s1092] %v1106
                %v1108 = vld [vmem:[%s1102 + $0x10] sm:%s1092]
                %1109 = vst [vmem:[%s1103 + $0x10] sm:%s1092] %v1108
                %v1110 = vld [vmem:[%s1102 + $0x18] sm:%s1092]
                %1111 = vst [vmem:[%s1103 + $0x18] sm:%s1092] %v1110
                %v1112 = vld [vmem:[%s1102 + $0x20] sm:%s1092]
                %1113 = vst [vmem:[%s1103 + $0x20] sm:%s1092] %v1112
                %v1114 = vld [vmem:[%s1102 + $0x28] sm:%s1092]
                %1115 = vst [vmem:[%s1103 + $0x28] sm:%s1092] %v1114
                %v1116 = vld [vmem:[%s1102 + $0x30] sm:%s1092]
                %1117 = vst [vmem:[%s1103 + $0x30] sm:%s1092] %v1116
                %v1118 = vld [vmem:[%s1102 + $0x38] sm:%s1092]
                %1119 = vst [vmem:[%s1103 + $0x38] sm:%s1092] %v1118
                %v1120 = vld [vmem:[%s1102 + $0x40] sm:%s1092]
                %1121 = vst [vmem:[%s1103 + $0x40] sm:%s1092] %v1120
                %v1122 = vld [vmem:[%s1102 + $0x48] sm:%s1092]
                %1123 = vst [vmem:[%s1103 + $0x48] sm:%s1092] %v1122
                %v1124 = vld [vmem:[%s1102 + $0x50] sm:%s1092]
                %1125 = vst [vmem:[%s1103 + $0x50] sm:%s1092] %v1124
                %v1126 = vld [vmem:[%s1102 + $0x58] sm:%s1092]
                %1127 = vst [vmem:[%s1103 + $0x58] sm:%s1092] %v1126
                %v1128 = vld [vmem:[%s1102 + $0x60] sm:%s1092]
                %1129 = vst [vmem:[%s1103 + $0x60] sm:%s1092] %v1128
                %s1130 = sadd.s32 1, %s1101
                %p1131 = scmp.ge.s32.totalorder %s1130, %s1093
                %s1132 = scalar_select %p1131, 0, %s1130
                %s1133 = smul.u32 %s1132, 104
                %s1134 = smul.u32 %s1132, 104
                %s1135 = scalar_lea.vmem %s1072, %s1133 [#allocation2]
                %s1136 = scalar_lea.vmem %s1083, %s1134
              $region73: #{tpu_custom_call.1} parent=67 // loop_footer
                %s1098 = sadd.s32 %s1096, 1
              $region74: #{tpu_custom_call.1} parent=67 // loop_footer_branch
                %1095 = sbr.rel target = $region70
              $region75: #{tpu_custom_call.1} parent=67 // loop_exit
                _
              %s1137 = sdiv.u32.pop %s1079, 13
              %s1138 = srem.u32.pop %s1079, 13
              %s1139 = smul.u32 %s1137, 13
              %s1140 = smul.u32 8, %s1139
              %s1141 = scalar_lea.vmem %s1072, %s1140 [#allocation2]
              %s1142 = smul.u32 8, %s1139
              %s1143 = scalar_lea.vmem %s1083, %s1142
              // While loop
              $region76: #{tpu_custom_call.1} parent=67 // loop_pre_header
                _
              $region77: #{tpu_custom_call.1} parent=67 // loop_header
                %s1145 = sphi 0, %s1147
                %p1146 = scmp.ge.s32.totalorder %s1145, %s1138
                %s1150 = sphi 0, %s1157
                %s1151 = sphi %s1141, %s1160
                %s1152 = sphi %s1143, %s1161
              $region78: #{tpu_custom_call.1} parent=67 // loop_header_branch
                %1149 = sbr.rel (%p1146) target = $region82
              $region79: #{tpu_custom_call.1} parent=67 // loop_body
                %v1153 = vld [vmem:[%s1151] sm:%s1092]
                %1154 = vst [vmem:[%s1152] sm:%s1092] %v1153
                %s1155 = sadd.s32 1, %s1150
                %p1156 = scmp.ge.s32.totalorder %s1155, %s1138
                %s1157 = scalar_select %p1156, 0, %s1155
                %s1158 = smul.u32 %s1157, 8
                %s1159 = smul.u32 %s1157, 8
                %s1160 = scalar_lea.vmem %s1141, %s1158 [#allocation2]
                %s1161 = scalar_lea.vmem %s1143, %s1159
              $region80: #{tpu_custom_call.1} parent=67 // loop_footer
                %s1147 = sadd.s32 %s1145, 1
              $region81: #{tpu_custom_call.1} parent=67 // loop_footer_branch
                %1144 = sbr.rel target = $region77
              $region82: #{tpu_custom_call.1} parent=67 // loop_exit
                _
            $region68: #{tpu_custom_call.1} parent=59 // pred_fallthru
              _
          $region60: #{tpu_custom_call.1} parent=55 // pred_fallthru
            _
          %1235 = vnop
        $region56: #{tpu_custom_call.1} parent=51 // pred_fallthru
          _
      $region52: #{tpu_custom_call.1} parent=5 // pred_fallthru
        _
      %p1236 = scmp.le.s32.totalorder 2, %s14
      // Predicated region
      $region105: #{tpu_custom_call.1} parent=5 // pred_check
        %p1237 = pneg %p1236
      $region106: #{tpu_custom_call.1} parent=5 // pred_check_branch
        %1239 = sbr.rel (%p1237) target = $region108
      $region107: #{tpu_custom_call.1} parent=5 // pred_region
        %s1240 = ssub.s32 %s14, 2
        // Predicated region
        $region109: #{tpu_custom_call.1} parent=107 // pred_check
          %p1241 = pneg %p216
        $region110: #{tpu_custom_call.1} parent=107 // pred_check_branch
          %1243 = sbr.rel (%p1241) target = $region112
        $region111: #{tpu_custom_call.1} parent=107 // pred_region
          %s1244 = sand.u32 %s201, 1
          %s1245 = sand.u32 %s201, 1
          %s1246 = smul.addr %s1245, 104
          %s1247 = scalar_lea.vmem [#allocation2], %s1246
        $region112: #{tpu_custom_call.1} parent=107 // pred_fallthru
          _
      $region108: #{tpu_custom_call.1} parent=5 // pred_fallthru
        _
    $region6: #{tpu_custom_call.1} parent=1 // loop_footer
      %s18 = sadd.s32 1, %s14
    $region7: #{tpu_custom_call.1} parent=1 // loop_footer_branch
      %13 = sbr.rel target = $region3
    $region8: #{tpu_custom_call.1} parent=1 // loop_exit
      _

</llo_original>
